<compile_context>
chip_gen: v6e
topology: v6e:2x2x1
jax: 0.10.0
libtpu: 0.0.40
codegen_flags: <defaults>
</compile_context>

<pallas_src>
import functools

import jax
import jax.numpy as jnp
from jax.experimental import pallas as pl
from jax.experimental.pallas import tpu as pltpu


_TARGET_TILE_BYTES = 2 * 1024 * 1024   # ~2 MiB per input tile (near-roofline streaming)
_MAX_TILE_BYTES = 4 * 1024 * 1024      # generation-safe cap (v7x has only 64 MiB VMEM)


def _cdiv(a, b):
    return -(-a // b)


def _round_up(a, b):
    return _cdiv(a, b) * b


def _ce_kernel(y_ref, p_ref, o_ref, acc_ref, *, tile_m, steps, rows, needs_mask):
    c = pl.program_id(0)   # parallel chunk axis (megacore on v7x)
    i = pl.program_id(1)   # sequential reduction axis within a chunk

    @pl.when(i == 0)
    def _init():
        acc_ref[...] = jnp.zeros_like(acc_ref)

    y = y_ref[...].astype(jnp.float32)
    p = p_ref[...].astype(jnp.float32)
    prod = y * jnp.log(p)                      # negation folded into the final scale

    if needs_mask:                             # static Python flag: only traced if M is ragged
        row_in_tile = jax.lax.broadcasted_iota(jnp.int32, prod.shape, 0)
        global_row = (c * steps + i) * tile_m + row_in_tile
        prod = jnp.where(global_row < rows, prod, 0.0)

    acc_ref[...] += prod                       # pure VPU adds, no per-step reduce / tiny store

    @pl.when(i == steps - 1)
    def _finalize():
        # One cross-lane reduce per chunk; broadcast into a lane-dense (8,128)
        # output block so the single writeback is an unmasked store.
        o_ref[...] = jnp.broadcast_to(jnp.sum(acc_ref[...]), o_ref.shape)


def cross_entropy(y, p, *, target_tile_bytes=_TARGET_TILE_BYTES, num_chunks=2):
    """mean(-(y * log(p))) computed with a Pallas TPU kernel. y, p: matching shapes."""
    assert y.shape == p.shape, "y and p must have identical shapes"

    # Purely elementwise + full mean -> flatten to 2-D (rows, cols).
    if y.ndim >= 2:
        y2 = y.reshape(-1, y.shape[-1])
        p2 = p.reshape(-1, p.shape[-1])
    else:
        y2 = y.reshape(1, -1)
        p2 = p.reshape(1, -1)
    M, N = y2.shape
    total_elems = M * N

    # --- Tile sizing: multi-MiB row tiles, sublane(8)-aligned, capped at the array.
    itemsize = jnp.dtype(y2.dtype).itemsize
    bytes_per_row = N * itemsize
    tile_bytes = min(max(target_tile_bytes, 8 * bytes_per_row), _MAX_TILE_BYTES)
    tile_m = max(8, (tile_bytes // bytes_per_row) // 8 * 8)
    tile_m = min(tile_m, _round_up(M, 8))      # don't over-allocate for small inputs
    # TODO(synk): for extremely wide N (a single 8-row tile >> the VMEM cap) a second
    # grid axis over N would be needed; typical class dims fit in one full-N block.

    total_tiles = _cdiv(M, tile_m)
    num_chunks = max(1, min(num_chunks, total_tiles))
    steps = _cdiv(total_tiles, num_chunks)
    needs_mask = (M % tile_m != 0) or (num_chunks * steps != total_tiles)

    # --- Explicit VMEM budget: 2 inputs x 2 pipeline buffers + f32 accumulator (+ headroom).
    in_tile_bytes = tile_m * N * itemsize
    acc_bytes = tile_m * N * 4
    vmem_budget = 4 * in_tile_bytes + acc_bytes
    vmem_limit = int(min(48 * 2**20, max(32 * 2**20, vmem_budget + 8 * 2**20)))

    def in_index_map(c, i):
        # Clamp so trailing "phantom" steps of the last chunk re-read a valid block;
        # their contribution is zeroed by the row mask.
        t = jnp.minimum(c * steps + i, total_tiles - 1)
        return (t, 0)

    kernel = functools.partial(
        _ce_kernel, tile_m=tile_m, steps=steps, rows=M, needs_mask=needs_mask)

    partials = pl.pallas_call(
        kernel,
        out_shape=jax.ShapeDtypeStruct((num_chunks, 8, 128), jnp.float32),
        grid_spec=pltpu.PrefetchScalarGridSpec(
            num_scalar_prefetch=0,
            grid=(num_chunks, steps),
            in_specs=[
                pl.BlockSpec((tile_m, N), in_index_map),
                pl.BlockSpec((tile_m, N), in_index_map),
            ],
            out_specs=pl.BlockSpec((1, 8, 128), lambda c, i: (c, 0, 0)),
            scratch_shapes=[pltpu.VMEM((tile_m, N), jnp.float32)],
        ),
        compiler_params=pltpu.CompilerParams(
            dimension_semantics=("parallel", "arbitrary"),
            vmem_limit_bytes=vmem_limit,
        ),
    )(y2, p2)

    # Per-chunk partial sums -> -sum / total (negation + mean folded into one scale).
    chunk_sums = partials[:, 0, 0]
    return -jnp.sum(chunk_sums) / jnp.float32(total_elems)


if __name__ == "__main__":
    root = jax.random.PRNGKey(0)

    def run_case(idx, shape, **kwargs):
        ky, kp = jax.random.split(jax.random.fold_in(root, idx))
        # y: non-negative "targets"; p: strictly positive "probabilities".
        y = jax.random.uniform(ky, shape, dtype=jnp.float32)
        p = jax.nn.softmax(jax.random.normal(kp, shape, dtype=jnp.float32), axis=-1)
        out = jax.block_until_ready(cross_entropy(y, p, **kwargs))
        ref = jnp.mean(-(y * jnp.log(p)))
        assert jnp.allclose(out, ref, rtol=1e-5, atol=1e-6), (idx, out, ref)

    # Small shapes consistent with an elementwise CE over (batch, classes).
    run_case(0, (16, 128))                                   # aligned, single tile
    run_case(1, (50, 128))                                   # ragged rows -> last-tile row mask
    run_case(2, (50, 128), target_tile_bytes=8 * 128 * 4)    # multi-tile + 2-chunk (megacore) path
    run_case(3, (2, 4, 32))                                  # >2-D input, narrow N (< 128 lanes)

    print("KERNEL_OK")
</pallas_src>

<mosaic_0001>
module attributes {stable_mosaic.version = 11 : i64} {
  func.func @_ce_kernel(%arg0: i32, %arg1: i32, %arg2: memref<16x128xf32, #tpu.memory_space<vmem>>, %arg3: memref<16x128xf32, #tpu.memory_space<vmem>>, %arg4: memref<1x8x128xf32, #tpu.memory_space<vmem>>, %arg5: memref<16x128xf32, #tpu.memory_space<vmem>>) attributes {dimension_semantics = [#tpu.dimension_semantics<parallel>, #tpu.dimension_semantics<arbitrary>], iteration_bounds = array<i64: 1, 1>, scalar_prefetch = 0 : i64, scratch_operands = 1 : i64, tpu.core_type = #tpu.core_type<tc>, window_params = [{transform_indices = @transform_0, window_bounds = array<i64: 16, 128>}, {transform_indices = @transform_1, window_bounds = array<i64: 16, 128>}, {transform_indices = @transform_2, window_bounds = array<i64: 1, 8, 128>}]} {
    %c0_i32 = arith.constant 0 : i32
    %0 = arith.cmpi eq, %arg1, %c0_i32 : i32
    %1 = arith.extui %0 : i1 to i32
    %c0_i32_0 = arith.constant 0 : i32
    %2 = arith.cmpi ne, %1, %c0_i32_0 : i32
    scf.if %2 {
      %cst = arith.constant 0.000000e+00 : f32
      %13 = vector.broadcast %cst : f32 to vector<16x128xf32>
      %c0_10 = arith.constant 0 : index
      %c0_11 = arith.constant 0 : index
      %14 = vector.load %arg5[%c0_10, %c0_11] : memref<16x128xf32, #tpu.memory_space<vmem>>, vector<16x128xf32>
      tpu.vector_store %arg5[%c0_10, %c0_11], %13 {strides = array<i32>} : memref<16x128xf32, #tpu.memory_space<vmem>>, vector<16x128xf32>,
    } else {
    }
    %c0 = arith.constant 0 : index
    %c0_1 = arith.constant 0 : index
    %3 = vector.load %arg2[%c0, %c0_1] : memref<16x128xf32, #tpu.memory_space<vmem>>, vector<16x128xf32>
    %c0_2 = arith.constant 0 : index
    %c0_3 = arith.constant 0 : index
    %4 = vector.load %arg3[%c0_2, %c0_3] : memref<16x128xf32, #tpu.memory_space<vmem>>, vector<16x128xf32>
    %5 = math.log %4 : vector<16x128xf32>
    %6 = arith.mulf %3, %5 : vector<16x128xf32>
    %c0_4 = arith.constant 0 : index
    %c0_5 = arith.constant 0 : index
    %7 = vector.load %arg5[%c0_4, %c0_5] : memref<16x128xf32, #tpu.memory_space<vmem>>, vector<16x128xf32>
    %8 = arith.addf %7, %6 : vector<16x128xf32>
    %c0_6 = arith.constant 0 : index
    %c0_7 = arith.constant 0 : index
    %9 = vector.load %arg5[%c0_6, %c0_7] : memref<16x128xf32, #tpu.memory_space<vmem>>, vector<16x128xf32>
    tpu.vector_store %arg5[%c0_6, %c0_7], %8 {strides = array<i32>} : memref<16x128xf32, #tpu.memory_space<vmem>>, vector<16x128xf32>,
    %c0_i32_8 = arith.constant 0 : i32
    %10 = arith.cmpi eq, %arg1, %c0_i32_8 : i32
    %11 = arith.extui %10 : i1 to i32
    %c0_i32_9 = arith.constant 0 : i32
    %12 = arith.cmpi ne, %11, %c0_i32_9 : i32
    scf.if %12 {
      %c0_10 = arith.constant 0 : index
      %c0_11 = arith.constant 0 : index
      %13 = vector.load %arg5[%c0_10, %c0_11] : memref<16x128xf32, #tpu.memory_space<vmem>>, vector<16x128xf32>
      %14 = vector.shape_cast %13 : vector<16x128xf32> to vector<1x16x128xf32>
      %cst = arith.constant dense<0.000000e+00> : vector<1xf32>
      %15 = vector.multi_reduction <add>, %14, %cst [1, 2] : vector<1x16x128xf32> to vector<1xf32>
      %16 = vector.shape_cast %15 : vector<1xf32> to vector<1x1x1xf32>
      %17 = vector.extract %16[0, 0, 0] : f32 from vector<1x1x1xf32>
      %18 = vector.broadcast %17 : f32 to vector<1x8x128xf32>
      %c0_12 = arith.constant 0 : index
      %c0_13 = arith.constant 0 : index
      %c0_14 = arith.constant 0 : index
      %19 = vector.load %arg4[%c0_12, %c0_13, %c0_14] : memref<1x8x128xf32, #tpu.memory_space<vmem>>, vector<1x8x128xf32>
      tpu.vector_store %arg4[%c0_12, %c0_13, %c0_14], %18 {strides = array<i32>} : memref<1x8x128xf32, #tpu.memory_space<vmem>>, vector<1x8x128xf32>,
    } else {
    }
    return
  }
  func.func @transform_0(%arg0: i32, %arg1: i32) -> (i32, i32) {
    %c1_i32 = arith.constant 1 : i32
    %0 = arith.muli %arg0, %c1_i32 : i32
    %1 = arith.addi %0, %arg1 : i32
    %c0_i32 = arith.constant 0 : i32
    %2 = arith.minsi %1, %c0_i32 : i32
    %c0_i32_0 = arith.constant 0 : i32
    %c0_i32_1 = arith.constant 0 : i32
    return %2, %c0_i32_0 : i32, i32
  }
  func.func @transform_1(%arg0: i32, %arg1: i32) -> (i32, i32) {
    %c1_i32 = arith.constant 1 : i32
    %0 = arith.muli %arg0, %c1_i32 : i32
    %1 = arith.addi %0, %arg1 : i32
    %c0_i32 = arith.constant 0 : i32
    %2 = arith.minsi %1, %c0_i32 : i32
    %c0_i32_0 = arith.constant 0 : i32
    %c0_i32_1 = arith.constant 0 : i32
    return %2, %c0_i32_0 : i32, i32
  }
  func.func @transform_2(%arg0: i32, %arg1: i32) -> (i32, i32, i32) {
    %c0_i32 = arith.constant 0 : i32
    %c0_i32_0 = arith.constant 0 : i32
    %c0_i32_1 = arith.constant 0 : i32
    return %arg0, %c0_i32, %c0_i32_0 : i32, i32, i32
  }
}

</mosaic_0001>

<llo_original>
// kernel: tpu_custom_call.1
$region0: #{tpu_custom_call.1}
  #allocation0 [shape = 'u32[]', space=smem, size = 0x4, offset = 0x4, fixed_abs, tag = 'smem constant byte address 0x4 - core index']
  #allocation1 [shape = 'u32[144,128]{1,0:T(1,128)}', space=vmem, size = 0x12000, scoped, tag = 'internal scratch']
  #allocation2 [shape = 'f32[16,128]{1,0:T(8,128)}', space=vmem, size = 0x2000, scoped, tag = 'scratch operand']
  %s0 = inlined_call_operand.hbm [shape: f32[16,128], index: 0, kind: input, shape index: {}]
  %s1 = inlined_call_operand.hbm [shape: f32[16,128], index: 1, kind: input, shape index: {}]
  %s2 = inlined_call_operand.hbm [shape: f32[1,8,128], index: 2, kind: output, shape index: {}]
  %s3 = sld [smem:[#allocation0]]
  $region34: #{tpu_custom_call.1} parent=0
    _
  %s5 = ssub.s32 1, %s3
  %s6 = scalar_select 0, %s5, %s3
  $region1: #{tpu_custom_call.1} parent=0
    #allocation3 [shape = 'u8[8192]{0}', space=vmem, size = 0x2000, scoped, tag = 'input window, operand 0, single buffered']
    #allocation4 [shape = 's32[1]{0}', space=sflag, size = 0x4, scoped, tag = 'scoped memory for tpu_custom_call.1']
    #allocation5 [shape = 's32[1]{0}', space=sflag, size = 0x4, scoped, tag = 'scoped memory for tpu_custom_call.1']
    #allocation6 [shape = 'u8[8192]{0}', space=vmem, size = 0x2000, scoped, tag = 'input window, operand 1, single buffered']
    #allocation7 [shape = 's32[1]{0}', space=sflag, size = 0x4, scoped, tag = 'scoped memory for tpu_custom_call.1']
    #allocation8 [shape = 'u8[4096]{0}', space=vmem, size = 0x1000, scoped, tag = 'output window, operand 0, single buffered']
    %7 = vsyncpa [#allocation4], 0
    %8 = vsyncpa [#allocation7], 0
    %9 = vsyncpa [#allocation5], 0
    // Predicated region
    $region2: #{tpu_custom_call.1} parent=1 // pred_check
      _
    $region3: #{tpu_custom_call.1} parent=1 // pred_check_branch
      %11 = sbr.rel (0) target = $region5
    $region4: #{tpu_custom_call.1} parent=1 // pred_region
      %s12 = sadd.s32 0, 0
      %p13 = scmp.lt.s32.totalorder %s12, 0
      %s14 = scalar_select %p13, %s12, 0
      %s15 = smul.u32 2, %s14
      %s17 = ssub.s32 256, 256
      %18 = vsyncadd [#allocation4], %s17
      %s19 = smul.addr %s15, 128
      %s20 = scalar_lea.hbm %s0, %s19
      %s21 = sshll.u32 [#allocation3], 4
      %s22 = int_to_ptr.vmem [resolvable:$true] %s21
      %27 = dma.hbm_to_vmem [thread:$0]  %s20, 256, %s22, [#allocation4], 128, 128, 8
    $region5: #{tpu_custom_call.1} parent=1 // pred_fallthru
      _
    // Predicated region
    $region6: #{tpu_custom_call.1} parent=1 // pred_check
      _
    $region7: #{tpu_custom_call.1} parent=1 // pred_check_branch
      %29 = sbr.rel (0) target = $region9
    $region8: #{tpu_custom_call.1} parent=1 // pred_region
      %s30 = sadd.s32 0, 0
      %p31 = scmp.lt.s32.totalorder %s30, 0
      %s32 = scalar_select %p31, %s30, 0
      %s33 = smul.u32 2, %s32
      %s35 = ssub.s32 256, 256
      %36 = vsyncadd [#allocation7], %s35
      %s37 = smul.addr %s33, 128
      %s38 = scalar_lea.hbm %s1, %s37
      %s39 = sshll.u32 [#allocation6], 4
      %s40 = int_to_ptr.vmem [resolvable:$true] %s39
      %45 = dma.hbm_to_vmem [thread:$0]  %s38, 256, %s40, [#allocation7], 128, 128, 8
    $region9: #{tpu_custom_call.1} parent=1 // pred_fallthru
      _
    // Predicated region
    $region10: #{tpu_custom_call.1} parent=1 // pred_check
      _
    $region11: #{tpu_custom_call.1} parent=1 // pred_check_branch
      %47 = sbr.rel (0) target = $region13
    $region12: #{tpu_custom_call.1} parent=1 // pred_region
      %48 = dma.done [#allocation4], 256
    $region13: #{tpu_custom_call.1} parent=1 // pred_fallthru
      _
    // Predicated region
    $region14: #{tpu_custom_call.1} parent=1 // pred_check
      _
    $region15: #{tpu_custom_call.1} parent=1 // pred_check_branch
      %50 = sbr.rel (0) target = $region17
    $region16: #{tpu_custom_call.1} parent=1 // pred_region
      %51 = dma.done [#allocation7], 256
    $region17: #{tpu_custom_call.1} parent=1 // pred_fallthru
      _
    %s52 = sadd.s32 0, 0
    %p53 = scmp.lt.s32.totalorder %s52, 0
    %s54 = scalar_select %p53, %s52, 0
    %s55 = smul.u32 2, %s54
    %s56 = sadd.s32 0, 0
    %p57 = scmp.lt.s32.totalorder %s56, 0
    %s58 = scalar_select %p57, %s56, 0
    %s59 = smul.u32 2, %s58
    %p60 = scmp.eq.s32.totalorder 0, 0
    // Predicated region
    $region18: #{tpu_custom_call.1} parent=1 // pred_check
      %p61 = pneg %p60
    $region19: #{tpu_custom_call.1} parent=1 // pred_check_branch
      %63 = sbr.rel (%p61) target = $region21
    $region20: #{tpu_custom_call.1} parent=1 // pred_region
      %64 = vst [vmem:[#allocation2] sm:$0xff] 0.0
      %65 = vst [vmem:[#allocation2 + $0x8] sm:$0xff] 0.0
    $region21: #{tpu_custom_call.1} parent=1 // pred_fallthru
      _
    %v66 = vld [vmem:[#allocation3] sm:$0xff]
    %v67 = vld [vmem:[#allocation3 + $0x8] sm:$0xff]
    %v68 = vld [vmem:[#allocation6] sm:$0xff]
    %v69 = vld [vmem:[#allocation6 + $0x8] sm:$0xff]
    %v70 = vlog2.pop %v68
    %v71 = vmul.f32 %v70, 0.6931472
    %v72 = vlog2.pop %v69
    %v73 = vmul.f32 %v72, 0.6931472
    %v74 = vmul.f32 %v66, %v71
    %v75 = vmul.f32 %v67, %v73
    %v76 = vld [vmem:[#allocation2] sm:$0xff]
    %v77 = vld [vmem:[#allocation2 + $0x8] sm:$0xff]
    %v78 = vadd.f32 %v76, %v74
    %v79 = vadd.f32 %v77, %v75
    %80 = vst [vmem:[#allocation2] sm:$0xff] %v78
    %81 = vst [vmem:[#allocation2 + $0x8] sm:$0xff] %v79
    // Predicated region
    $region22: #{tpu_custom_call.1} parent=1 // pred_check
      %p82 = pneg %p60
    $region23: #{tpu_custom_call.1} parent=1 // pred_check_branch
      %84 = sbr.rel (%p82) target = $region25
    $region24: #{tpu_custom_call.1} parent=1 // pred_region
      %v85 = vld [vmem:[#allocation2] sm:$0xff]
      %v86 = vld [vmem:[#allocation2 + $0x8] sm:$0xff]
      %v87 = vadd.f32 %v85, %v86
      %88 = vadd.xlane.f32.xlu0 %v87
      %v89 = vpop.xlane.xlu0 %88
      %v90 = vrot.slane %v89, 4
      %v91 = vadd.f32 %v89, %v90
      %v92 = vrot.slane %v91, 2
      %v93 = vadd.f32 %v91, %v92
      %v94 = vrot.slane %v93, 1
      %v95 = vadd.f32 %v93, %v94
      %s96 = vtos %v95
      %v97 = vstv %s96
      %98 = vst [vmem:[#allocation8] sm:$0xff] %v97
    $region25: #{tpu_custom_call.1} parent=1 // pred_fallthru
      _
    // Predicated region
    $region26: #{tpu_custom_call.1} parent=1 // pred_check
      _
    $region27: #{tpu_custom_call.1} parent=1 // pred_check_branch
      %100 = sbr.rel (0) target = $region29
    $region28: #{tpu_custom_call.1} parent=1 // pred_region
      %s102 = ssub.s32 128, 128
      %103 = vsyncadd [#allocation5], %s102
      %s105 = sshll.u32 [#allocation8], 4
      %s106 = int_to_ptr.vmem [resolvable:$true] %s105
      %108 = dma.vmem_to_hbm [thread:$0]  %s106, 128, %s2, [#allocation5]
    $region29: #{tpu_custom_call.1} parent=1 // pred_fallthru
      _
    // Predicated region
    $region30: #{tpu_custom_call.1} parent=1 // pred_check
      _
    $region31: #{tpu_custom_call.1} parent=1 // pred_check_branch
      %110 = sbr.rel (0) target = $region33
    $region32: #{tpu_custom_call.1} parent=1 // pred_region
      %111 = dma.done [#allocation5], 128
    $region33: #{tpu_custom_call.1} parent=1 // pred_fallthru
      _
    %112 = vsyncpa [#allocation4], 1
    %113 = vsyncpa [#allocation7], 1
    %114 = vsyncpa [#allocation5], 1

</llo_original>
